<compile_context>
chip_gen: v7x
topology: tpu7x:2x2x1
jax: 0.10.0
libtpu: 0.0.40
codegen_flags: <defaults>
</compile_context>

<pallas_src>
import functools

import jax
import jax.numpy as jnp
from jax.experimental import pallas as pl
from jax.experimental.pallas import tpu as pltpu


def _round_up(x, m):
    return (x + m - 1) // m * m


# -----------------------------------------------------------------------------
# Pallas kernel: fused  logits^T = W^T @ X^T + b ;  online LSE entropy over V
# -----------------------------------------------------------------------------
def _entropy_kernel(wt_ref, xt_ref, b_ref, out_ref, m_sc, s_sc, u_sc):
    # wt_ref: (tv, D) bf16   xt_ref: (D, tm) bf16   b_ref: (tv, 1) f32
    # out_ref: (1, 1, tm) f32   scratch m/s/u: (1, tm) f32
    j = pl.program_id(1)

    @pl.when(j == 0)
    def _():
        m_sc[...] = jnp.full_like(m_sc, -jnp.inf)
        s_sc[...] = jnp.zeros_like(s_sc)
        u_sc[...] = jnp.zeros_like(u_sc)

    # transposed logits block (tv, tm); bf16 MXU matmul with f32 accumulation
    logits = jnp.dot(wt_ref[...], xt_ref[...],
                     preferred_element_type=jnp.float32)
    logits = logits + b_ref[...]                       # (tv, 1) lane-broadcast

    m_prev = m_sc[...]                                                # (1, tm)
    m_new = jnp.maximum(m_prev, jnp.max(logits, axis=0, keepdims=True))
    alpha = jnp.exp(m_prev - m_new)
    e = jnp.exp(logits - m_new)                                       # (tv, tm)
    s_sc[...] = alpha * s_sc[...] + jnp.sum(e, axis=0, keepdims=True)
    u_sc[...] = alpha * u_sc[...] + jnp.sum(e * logits, axis=0, keepdims=True)
    m_sc[...] = m_new

    @pl.when(j == pl.num_programs(1) - 1)
    def _():
        s = s_sc[...]
        inv_s = pl.reciprocal(s, approx=True)
        # H = logsumexp(l) - E_p[l] = (m + log s) - u / s
        out_ref[0] = m_sc[...] + jnp.log(s) - u_sc[...] * inv_s


def compute_entropies(x2d, w, bias, *, tm=256, tv=128):
    """x2d: (M, D) f32, w: (D, V) f32, bias: (V,) f32 -> entropies (M,) f32."""
    M, D = x2d.shape
    V = w.shape[1]

    tm = min(tm, _round_up(M, 128))          # lane-dense output rows
    m_pad = _round_up(M, tm)
    tv = min(tv, V)
    if V % tv != 0:
        tv = V  # TODO(synk): pad vocab axis (bias = -inf) to support ragged V
    n_m, n_v = m_pad // tm, V // tv

    x_b = x2d.astype(jnp.bfloat16)
    if m_pad != M:
        x_b = jnp.pad(x_b, ((0, m_pad - M), (0, 0)))
    xt = x_b.T                                     # (D, m_pad) bf16
    wt = w.astype(jnp.bfloat16).T                  # (V, D)     bf16
    b2 = bias.astype(jnp.float32).reshape(V, 1)    # (V, 1)     f32

    # VMEM budget: double-buffered blocks + f32 intermediates, 2x headroom.
    est = (2 * tv * D * 2 + 2 * D * tm * 2 + 2 * tv * 4 + 2 * tm * 4
           + 3 * tm * 4 + 4 * tv * tm * 4)
    vmem_limit = int(max(2 * est, 16 * 2 ** 20))

    out = pl.pallas_call(
        _entropy_kernel,
        out_shape=jax.ShapeDtypeStruct((n_m, 1, tm), jnp.float32),
        grid_spec=pltpu.PrefetchScalarGridSpec(
            num_scalar_prefetch=0,
            grid=(n_m, n_v),
            in_specs=[
                pl.BlockSpec((tv, D), lambda i, j: (j, 0)),    # W^T tile
                pl.BlockSpec((D, tm), lambda i, j: (0, i)),    # X^T tile
                pl.BlockSpec((tv, 1), lambda i, j: (j, 0)),    # bias column
            ],
            out_specs=pl.BlockSpec((1, 1, tm), lambda i, j: (i, 0, 0)),
            scratch_shapes=[pltpu.VMEM((1, tm), jnp.float32)] * 3,
        ),
        compiler_params=pltpu.CompilerParams(
            dimension_semantics=("parallel", "arbitrary"),
            vmem_limit_bytes=vmem_limit),
    )(wt, xt, b2)
    return out.reshape(m_pad)[:M]


# -----------------------------------------------------------------------------
# Plain-JAX glue reproducing the boundary / token-length bookkeeping
# -----------------------------------------------------------------------------
def _apply_max_token_size(boundaries, max_token_size, mask):
    B, N = boundaries.shape
    bint = boundaries.astype(jnp.int32)
    token_ids = jnp.cumsum(bint, axis=-1)
    # F.pad(token_ids, (1, -1), value=0)  ->  right shift by one, prepend 0
    token_ids = jnp.concatenate(
        [jnp.zeros((B, 1), jnp.int32), token_ids[:, :-1]], axis=-1)
    # j dimension bounded by N (>= max_num_tokens); extra rows contribute nothing
    j = jnp.arange(N, dtype=jnp.int32)
    token_mask = j[None, :, None] == token_ids[:, None, :]          # (B, J, N)
    token_sub_seq_arange = jnp.cumsum(token_mask.astype(jnp.int32), axis=-1)
    sub_seq_boundaries = (token_sub_seq_arange % max_token_size) == 0
    sub_seq_boundaries = jnp.any(sub_seq_boundaries & token_mask, axis=1)
    boundaries = boundaries | sub_seq_boundaries
    if mask is not None:
        boundaries = boundaries & mask
    return boundaries


def _token_lengths_from_boundaries(boundaries, num_tokens):
    """Equivalent of ragged split + diff + pad_sequence, padded out to N."""
    B, N = boundaries.shape
    pos = jnp.arange(1, N + 1, dtype=jnp.int32)                      # arange + 1
    rank = jnp.cumsum(boundaries.astype(jnp.int32), axis=-1) - 1     # index among boundaries
    idx = jnp.where(boundaries, rank, N)                             # N -> dropped (OOB)
    ends = jnp.zeros((B, N), jnp.int32).at[
        jnp.arange(B)[:, None], idx
    ].set(jnp.broadcast_to(pos[None, :], (B, N)), mode="drop")
    starts = jnp.concatenate(
        [jnp.zeros((B, 1), jnp.int32), ends[:, :-1]], axis=-1)       # F.pad(..., (1,0))
    lengths = ends - starts
    valid = jnp.arange(N, dtype=jnp.int32)[None, :] < num_tokens[:, None]
    return jnp.where(valid, lengths, 0)


@functools.partial(jax.jit, static_argnames=("entropy_threshold", "max_token_size",
                                             "has_lens"))
def entropy_tokenizer_forward(seq, emb, w, bias, lens, *, entropy_threshold,
                              max_token_size=None, has_lens=False):
    B, N = seq.shape
    D = emb.shape[1]

    # decoder: embedding lookup (glue) + fused bf16 matmul / entropy (Pallas)
    # TODO(synk): the embedding gather could be fused into the kernel via a
    # scalar-prefetch DMA row-gather to avoid the HBM round trip of x.
    x = emb[seq].reshape(B * N, D)                                   # (B*N, D)
    entropies = compute_entropies(x, w, bias).reshape(B, N)

    arange = jnp.arange(N, dtype=jnp.int32)
    mask = (arange[None, :] < lens[:, None]) if has_lens else None

    over_thres_mask = entropies >= entropy_threshold
    if mask is not None:
        over_thres_mask = over_thres_mask & mask

    boundaries = over_thres_mask
    if not has_lens:
        boundaries = boundaries.at[:, -1].set(True)
    else:
        boundaries = boundaries.at[
            jnp.arange(B), jnp.maximum(lens - 1, 0)].set(True)

    if max_token_size is not None:
        boundaries = _apply_max_token_size(boundaries, max_token_size, mask)

    num_tokens = jnp.sum(boundaries.astype(jnp.int32), axis=-1)
    token_lengths = _token_lengths_from_boundaries(boundaries, num_tokens)
    return token_lengths, num_tokens, entropies


# TODO(synk): return_segmented_seq=True returns a ragged python list of tensors;
# no fixed-shape Pallas/JAX equivalent, so only the token_lengths path is built.


if __name__ == "__main__":
    # small, deterministic setup
    B, N, D, V = 2, 16, 32, 256
    entropy_threshold = 5.2
    max_token_size = 4

    key = jax.random.PRNGKey(0)
    k_seq, k_emb, k_w, k_b = jax.random.split(key, 4)
    seq = jax.random.randint(k_seq, (B, N), 0, V, dtype=jnp.int32)
    emb = jax.random.normal(k_emb, (V, D), dtype=jnp.float32)
    w = jax.random.normal(k_w, (D, V), dtype=jnp.float32) / jnp.sqrt(D)
    bias = jax.random.normal(k_b, (V,), dtype=jnp.float32) * 0.1
    lens = jnp.zeros((B,), jnp.int32)   # unused (has_lens=False)

    token_lengths, num_tokens, entropies = entropy_tokenizer_forward(
        seq, emb, w, bias, lens,
        entropy_threshold=entropy_threshold,
        max_token_size=max_token_size,
        has_lens=False,
    )
    jax.block_until_ready((token_lengths, num_tokens, entropies))

    # sanity-check the Pallas entropy against a pure-JAX reference that uses
    # the same bf16-cast matmul operands (kernel's intentional precision choice)
    x_ref = emb.astype(jnp.bfloat16).astype(jnp.float32)[seq].reshape(B * N, D)
    w_ref = w.astype(jnp.bfloat16).astype(jnp.float32)
    logits_ref = x_ref @ w_ref + bias[None, :]
    prob_ref = jax.nn.softmax(logits_ref, axis=-1)
    ent_ref = -(prob_ref * jnp.log(jnp.maximum(prob_ref, 1e-20))).sum(-1)
    ent_ref = ent_ref.reshape(B, N)
    max_err = float(jnp.max(jnp.abs(entropies - ent_ref)))
    assert jnp.allclose(entropies, ent_ref, atol=1e-2, rtol=1e-3), max_err

    # trim padded token_lengths to max number of tokens (like pad_sequence)
    max_num_tokens = int(jnp.max(num_tokens))
    token_lengths = token_lengths[:, :max_num_tokens]
    assert token_lengths.shape == (B, max_num_tokens)
    # each row of lengths must sum to the sequence length (no lens given)
    assert bool(jnp.all(token_lengths.sum(-1) == N))

    print("KERNEL_OK")
</pallas_src>

<mosaic_0001>
module attributes {stable_mosaic.version = 11 : i64} {
  func.func @_entropy_kernel(%arg0: i32, %arg1: i32, %arg2: memref<128x32xbf16, #tpu.memory_space<vmem>>, %arg3: memref<32x128xbf16, #tpu.memory_space<vmem>>, %arg4: memref<128x1xf32, #tpu.memory_space<vmem>>, %arg5: memref<1x1x128xf32, #tpu.memory_space<vmem>>, %arg6: memref<1x128xf32, #tpu.memory_space<vmem>>, %arg7: memref<1x128xf32, #tpu.memory_space<vmem>>, %arg8: memref<1x128xf32, #tpu.memory_space<vmem>>) attributes {dimension_semantics = [#tpu.dimension_semantics<parallel>, #tpu.dimension_semantics<arbitrary>], iteration_bounds = array<i64: 1, 2>, scalar_prefetch = 0 : i64, scratch_operands = 3 : i64, tpu.core_type = #tpu.core_type<tc>, window_params = [{transform_indices = @transform_0, window_bounds = array<i64: 128, 32>}, {transform_indices = @transform_1, window_bounds = array<i64: 32, 128>}, {transform_indices = @transform_2, window_bounds = array<i64: 128, 1>}, {transform_indices = @transform_3, window_bounds = array<i64: 1, 1, 128>}]} {
    %c0_i32 = arith.constant 0 : i32
    %0 = arith.cmpi eq, %arg1, %c0_i32 : i32
    %1 = arith.extui %0 : i1 to i32
    %c0_i32_0 = arith.constant 0 : i32
    %2 = arith.cmpi ne, %1, %c0_i32_0 : i32
    scf.if %2 {
      %cst_22 = arith.constant 0xFF800000 : f32
      %35 = vector.broadcast %cst_22 : f32 to vector<1x128xf32>
      %c0_23 = arith.constant 0 : index
      %c0_24 = arith.constant 0 : index
      %36 = vector.load %arg6[%c0_23, %c0_24] : memref<1x128xf32, #tpu.memory_space<vmem>>, vector<1x128xf32>
      tpu.vector_store %arg6[%c0_23, %c0_24], %35 {strides = array<i32>} : memref<1x128xf32, #tpu.memory_space<vmem>>, vector<1x128xf32>,
      %cst_25 = arith.constant 0.000000e+00 : f32
      %37 = vector.broadcast %cst_25 : f32 to vector<1x128xf32>
      %c0_26 = arith.constant 0 : index
      %c0_27 = arith.constant 0 : index
      %38 = vector.load %arg7[%c0_26, %c0_27] : memref<1x128xf32, #tpu.memory_space<vmem>>, vector<1x128xf32>
      tpu.vector_store %arg7[%c0_26, %c0_27], %37 {strides = array<i32>} : memref<1x128xf32, #tpu.memory_space<vmem>>, vector<1x128xf32>,
      %cst_28 = arith.constant 0.000000e+00 : f32
      %39 = vector.broadcast %cst_28 : f32 to vector<1x128xf32>
      %c0_29 = arith.constant 0 : index
      %c0_30 = arith.constant 0 : index
      %40 = vector.load %arg8[%c0_29, %c0_30] : memref<1x128xf32, #tpu.memory_space<vmem>>, vector<1x128xf32>
      tpu.vector_store %arg8[%c0_29, %c0_30], %39 {strides = array<i32>} : memref<1x128xf32, #tpu.memory_space<vmem>>, vector<1x128xf32>,
    } else {
    }
    %c0 = arith.constant 0 : index
    %c0_1 = arith.constant 0 : index
    %3 = vector.load %arg2[%c0, %c0_1] : memref<128x32xbf16, #tpu.memory_space<vmem>>, vector<128x32xbf16>
    %c0_2 = arith.constant 0 : index
    %c0_3 = arith.constant 0 : index
    %4 = vector.load %arg3[%c0_2, %c0_3] : memref<32x128xbf16, #tpu.memory_space<vmem>>, vector<32x128xbf16>
    %cst = arith.constant dense<0.000000e+00> : vector<128x128xf32>
    %5 = tpu.matmul %3, %4, %cst {dimension_numbers = #tpu.dot_dimension_numbers<[1], [0], [0], [1], [0, 0, 1, 1], [], []>} : vector<128x32xbf16>, vector<32x128xbf16>, vector<128x128xf32> -> vector<128x128xf32>
    %c0_4 = arith.constant 0 : index
    %c0_5 = arith.constant 0 : index
    %6 = vector.load %arg4[%c0_4, %c0_5] : memref<128x1xf32, #tpu.memory_space<vmem>>, vector<128x1xf32>
    %7 = vector.broadcast %6 : vector<128x1xf32> to vector<128x128xf32>
    %8 = arith.addf %5, %7 : vector<128x128xf32>
    %c0_6 = arith.constant 0 : index
    %c0_7 = arith.constant 0 : index
    %9 = vector.load %arg6[%c0_6, %c0_7] : memref<1x128xf32, #tpu.memory_space<vmem>>, vector<1x128xf32>
    %cst_8 = arith.constant dense<0xFF800000> : vector<128xf32>
    %10 = vector.multi_reduction <maximumf>, %8, %cst_8 [0] : vector<128x128xf32> to vector<128xf32>
    %11 = vector.shape_cast %10 : vector<128xf32> to vector<1x128xf32>
    %12 = arith.maximumf %9, %11 : vector<1x128xf32>
    %13 = arith.subf %9, %12 : vector<1x128xf32>
    %14 = math.exp %13 : vector<1x128xf32>
    %15 = vector.broadcast %12 : vector<1x128xf32> to vector<128x128xf32>
    %16 = arith.subf %8, %15 : vector<128x128xf32>
    %17 = math.exp %16 : vector<128x128xf32>
    %c0_9 = arith.constant 0 : index
    %c0_10 = arith.constant 0 : index
    %18 = vector.load %arg7[%c0_9, %c0_10] : memref<1x128xf32, #tpu.memory_space<vmem>>, vector<1x128xf32>
    %19 = arith.mulf %14, %18 : vector<1x128xf32>
    %cst_11 = arith.constant dense<0.000000e+00> : vector<128xf32>
    %20 = vector.multi_reduction <add>, %17, %cst_11 [0] : vector<128x128xf32> to vector<128xf32>
    %21 = vector.shape_cast %20 : vector<128xf32> to vector<1x128xf32>
    %22 = arith.addf %19, %21 : vector<1x128xf32>
    %c0_12 = arith.constant 0 : index
    %c0_13 = arith.constant 0 : index
    %23 = vector.load %arg7[%c0_12, %c0_13] : memref<1x128xf32, #tpu.memory_space<vmem>>, vector<1x128xf32>
    tpu.vector_store %arg7[%c0_12, %c0_13], %22 {strides = array<i32>} : memref<1x128xf32, #tpu.memory_space<vmem>>, vector<1x128xf32>,
    %c0_14 = arith.constant 0 : index
    %c0_15 = arith.constant 0 : index
    %24 = vector.load %arg8[%c0_14, %c0_15] : memref<1x128xf32, #tpu.memory_space<vmem>>, vector<1x128xf32>
    %25 = arith.mulf %14, %24 : vector<1x128xf32>
    %26 = arith.mulf %17, %8 : vector<128x128xf32>
    %cst_16 = arith.constant dense<0.000000e+00> : vector<128xf32>
    %27 = vector.multi_reduction <add>, %26, %cst_16 [0] : vector<128x128xf32> to vector<128xf32>
    %28 = vector.shape_cast %27 : vector<128xf32> to vector<1x128xf32>
    %29 = arith.addf %25, %28 : vector<1x128xf32>
    %c0_17 = arith.constant 0 : index
    %c0_18 = arith.constant 0 : index
    %30 = vector.load %arg8[%c0_17, %c0_18] : memref<1x128xf32, #tpu.memory_space<vmem>>, vector<1x128xf32>
    tpu.vector_store %arg8[%c0_17, %c0_18], %29 {strides = array<i32>} : memref<1x128xf32, #tpu.memory_space<vmem>>, vector<1x128xf32>,
    %c0_19 = arith.constant 0 : index
    %c0_20 = arith.constant 0 : index
    %31 = vector.load %arg6[%c0_19, %c0_20] : memref<1x128xf32, #tpu.memory_space<vmem>>, vector<1x128xf32>
    tpu.vector_store %arg6[%c0_19, %c0_20], %12 {strides = array<i32>} : memref<1x128xf32, #tpu.memory_space<vmem>>, vector<1x128xf32>,
    %c1_i32 = arith.constant 1 : i32
    %32 = arith.cmpi eq, %arg1, %c1_i32 : i32
    %33 = arith.extui %32 : i1 to i32
    %c0_i32_21 = arith.constant 0 : i32
    %34 = arith.cmpi ne, %33, %c0_i32_21 : i32
    scf.if %34 {
      %c0_22 = arith.constant 0 : index
      %c0_23 = arith.constant 0 : index
      %35 = vector.load %arg7[%c0_22, %c0_23] : memref<1x128xf32, #tpu.memory_space<vmem>>, vector<1x128xf32>
      %36 = tpu.reciprocal %35 {approx = true} : vector<1x128xf32> -> vector<1x128xf32>
      %c0_24 = arith.constant 0 : index
      %c0_25 = arith.constant 0 : index
      %37 = vector.load %arg6[%c0_24, %c0_25] : memref<1x128xf32, #tpu.memory_space<vmem>>, vector<1x128xf32>
      %38 = math.log %35 : vector<1x128xf32>
      %39 = arith.addf %37, %38 : vector<1x128xf32>
      %c0_26 = arith.constant 0 : index
      %c0_27 = arith.constant 0 : index
      %40 = vector.load %arg8[%c0_26, %c0_27] : memref<1x128xf32, #tpu.memory_space<vmem>>, vector<1x128xf32>
      %41 = arith.mulf %40, %36 : vector<1x128xf32>
      %42 = arith.subf %39, %41 : vector<1x128xf32>
      %c0_28 = arith.constant 0 : index
      %c0_29 = arith.constant 0 : index
      %c0_30 = arith.constant 0 : index
      %43 = vector.load %arg5[%c0_28, %c0_29, %c0_30] : memref<1x1x128xf32, #tpu.memory_space<vmem>>, vector<1x1x128xf32>
      %44 = vector.shape_cast %43 : vector<1x1x128xf32> to vector<1x128xf32>
      %45 = vector.shape_cast %42 : vector<1x128xf32> to vector<1x1x128xf32>
      tpu.vector_store %arg5[%c0_28, %c0_29, %c0_30], %45 {strides = array<i32>} : memref<1x1x128xf32, #tpu.memory_space<vmem>>, vector<1x1x128xf32>,
    } else {
    }
    return
  }
  func.func @transform_0(%arg0: i32, %arg1: i32) -> (i32, i32) {
    %c0_i32 = arith.constant 0 : i32
    %c0_i32_0 = arith.constant 0 : i32
    return %arg1, %c0_i32 : i32, i32
  }
  func.func @transform_1(%arg0: i32, %arg1: i32) -> (i32, i32) {
    %c0_i32 = arith.constant 0 : i32
    %c0_i32_0 = arith.constant 0 : i32
    return %c0_i32, %arg0 : i32, i32
  }
  func.func @transform_2(%arg0: i32, %arg1: i32) -> (i32, i32) {
    %c0_i32 = arith.constant 0 : i32
    %c0_i32_0 = arith.constant 0 : i32
    return %arg1, %c0_i32 : i32, i32
  }
  func.func @transform_3(%arg0: i32, %arg1: i32) -> (i32, i32, i32) {
    %c0_i32 = arith.constant 0 : i32
    %c0_i32_0 = arith.constant 0 : i32
    %c0_i32_1 = arith.constant 0 : i32
    return %arg0, %c0_i32, %c0_i32_0 : i32, i32, i32
  }
}

</mosaic_0001>

<llo_original>
// kernel: entropy_tokenizer_forward.1
$region0: #{entropy_tokenizer_forward.1}
  #allocation0 [shape = 'u32[]', space=smem, size = 0x4, offset = 0x4, fixed_abs, tag = 'smem constant byte address 0x4 - core index']
  #allocation1 [shape = 'u32[144,128]{1,0:T(1,128)}', space=vmem, size = 0x12000, scoped, tag = 'internal scratch']
  #allocation2 [shape = 'f32[1,128]{1,0:T(1,128)}', space=vmem, size = 0x200, scoped, tag = 'scratch operand']
  #allocation3 [shape = 'f32[1,128]{1,0:T(1,128)}', space=vmem, size = 0x200, scoped, tag = 'scratch operand']
  #allocation4 [shape = 'f32[1,128]{1,0:T(1,128)}', space=vmem, size = 0x200, scoped, tag = 'scratch operand']
  %s0 = inlined_call_operand.vmem [shape: bf16[256,32], index: 0, kind: input, shape index: {}]
  %s1 = inlined_call_operand.vmem [shape: bf16[32,128], index: 1, kind: input, shape index: {}]
  %s2 = inlined_call_operand.vmem [shape: f32[256,1], index: 2, kind: input, shape index: {}]
  %s3 = inlined_call_operand.vmem [shape: f32[1,1,128], index: 3, kind: output, shape index: {}]
  %s4 = sld [smem:[#allocation0]]
  $region53: #{entropy_tokenizer_forward.1} parent=0
    _
  %s6 = ssub.s32 1, %s4
  %s7 = scalar_select 0, %s6, %s4
  loop: start=0, step=1, limit=4
  $region2: #{entropy_tokenizer_forward.1} parent=0 // loop_pre_header
    _
  $region3: #{entropy_tokenizer_forward.1} parent=0 // loop_header
    %s9 = sphi 0, %s13
    %p10 = scmp.ge.s32.totalorder %s9, 4
    %s16 = sphi 0, %s28
    %s17 = sphi 0, %s24
    %s18 = sphi 0, %s16
    %s19 = sphi 0, %s17
    %s20 = sphi 0, %s18
    %s21 = sphi 0, %s19
    %s31 = sphi 0, %s33
    %s34 = sphi 0, %s31
    %s35 = sphi 0, %s34
    %s51 = sphi 0, %s35
    %s57 = sphi 0, %s59
    %s60 = sphi 0, %s57
    %s61 = sphi 0, %s60
    %s77 = sphi 0, %s61
    %s83 = sphi 0, %s85
    %s86 = sphi 0, %s83
    %s87 = sphi 0, %s86
    %s103 = sphi 0, %s87
    %s109 = sphi 0, %s111
    %s112 = sphi 0, %s109
    %s113 = sphi 0, %s112
    %s129 = sphi 0, %s113
  $region4: #{entropy_tokenizer_forward.1} parent=0 // loop_header_branch
    %12 = sbr.rel (%p10) target = $region8
  $region5: #{entropy_tokenizer_forward.1} parent=0 // loop_body
    %s14 = ssub.s32 %s9, 1
    %s15 = ssub.s32 %s9, 2
    %s22 = sadd.s32 1, %s17
    %p23 = scmp.ge.s32.totalorder %s22, 2
    %s24 = scalar_select %p23, 0, %s22
    %s25 = sadd.s32 1, %s16
    %s26 = scalar_select %p23, %s25, %s16
    %p27 = scmp.ge.s32.totalorder %s26, 1
    %s28 = scalar_select %p27, 0, %s26
    %s29 = ssub.s32 %s17, %s24
    %p30 = scmp.eq.s32.totalorder %s29, 0
    %s32 = sadd.s32 %s31, 1
    %s33 = scalar_select %p30, %s31, %s32
    %p36 = pneg %p30
    %p37 = scmp.eq.s32.totalorder %s9, 1
    %p38 = por %p36, %p37
    %p39 = scmp.ne.s32.totalorder %s31, %s34
    %p40 = scmp.eq.s32.totalorder %s9, 0
    %p41 = por %p39, %p40
    %p42 = scmp.ne.s32.totalorder %s31, %s34
    %p43 = scmp.eq.s32.totalorder %s14, 1
    %p44 = por %p42, %p43
    %p45 = scmp.ne.s32.totalorder %s34, %s35
    %p46 = scmp.eq.s32.totalorder %s14, 0
    %p47 = por %p45, %p46
    %p48 = scmp.ne.s32.totalorder %s34, %s35
    %p49 = scmp.eq.s32.totalorder %s15, 1
    %p50 = por %p48, %p49
    %p52 = scmp.ne.s32.totalorder %s35, %s51
    %p53 = scmp.eq.s32.totalorder %s15, 0
    %p54 = por %p52, %p53
    %s55 = ssub.s32 %s16, %s28
    %p56 = scmp.eq.s32.totalorder %s55, 0
    %s58 = sadd.s32 %s57, 1
    %s59 = scalar_select %p56, %s57, %s58
    %p62 = pneg %p56
    %p63 = scmp.eq.s32.totalorder %s9, 1
    %p64 = por %p62, %p63
    %p65 = scmp.ne.s32.totalorder %s57, %s60
    %p66 = scmp.eq.s32.totalorder %s9, 0
    %p67 = por %p65, %p66
    %p68 = scmp.ne.s32.totalorder %s57, %s60
    %p69 = scmp.eq.s32.totalorder %s14, 1
    %p70 = por %p68, %p69
    %p71 = scmp.ne.s32.totalorder %s60, %s61
    %p72 = scmp.eq.s32.totalorder %s14, 0
    %p73 = por %p71, %p72
    %p74 = scmp.ne.s32.totalorder %s60, %s61
    %p75 = scmp.eq.s32.totalorder %s15, 1
    %p76 = por %p74, %p75
    %p78 = scmp.ne.s32.totalorder %s61, %s77
    %p79 = scmp.eq.s32.totalorder %s15, 0
    %p80 = por %p78, %p79
    %s81 = ssub.s32 %s17, %s24
    %p82 = scmp.eq.s32.totalorder %s81, 0
    %s84 = sadd.s32 %s83, 1
    %s85 = scalar_select %p82, %s83, %s84
    %p88 = pneg %p82
    %p89 = scmp.eq.s32.totalorder %s9, 1
    %p90 = por %p88, %p89
    %p91 = scmp.ne.s32.totalorder %s83, %s86
    %p92 = scmp.eq.s32.totalorder %s9, 0
    %p93 = por %p91, %p92
    %p94 = scmp.ne.s32.totalorder %s83, %s86
    %p95 = scmp.eq.s32.totalorder %s14, 1
    %p96 = por %p94, %p95
    %p97 = scmp.ne.s32.totalorder %s86, %s87
    %p98 = scmp.eq.s32.totalorder %s14, 0
    %p99 = por %p97, %p98
    %p100 = scmp.ne.s32.totalorder %s86, %s87
    %p101 = scmp.eq.s32.totalorder %s15, 1
    %p102 = por %p100, %p101
    %p104 = scmp.ne.s32.totalorder %s87, %s103
    %p105 = scmp.eq.s32.totalorder %s15, 0
    %p106 = por %p104, %p105
    %s107 = ssub.s32 %s16, %s28
    %p108 = scmp.eq.s32.totalorder %s107, 0
    %s110 = sadd.s32 %s109, 1
    %s111 = scalar_select %p108, %s109, %s110
    %p114 = pneg %p108
    %p115 = scmp.eq.s32.totalorder %s9, 1
    %p116 = por %p114, %p115
    %p117 = scmp.ne.s32.totalorder %s109, %s112
    %p118 = scmp.eq.s32.totalorder %s9, 0
    %p119 = por %p117, %p118
    %p120 = scmp.ne.s32.totalorder %s109, %s112
    %p121 = scmp.eq.s32.totalorder %s14, 1
    %p122 = por %p120, %p121
    %p123 = scmp.ne.s32.totalorder %s112, %s113
    %p124 = scmp.eq.s32.totalorder %s14, 0
    %p125 = por %p123, %p124
    %p126 = scmp.ne.s32.totalorder %s112, %s113
    %p127 = scmp.eq.s32.totalorder %s15, 1
    %p128 = por %p126, %p127
    %p130 = scmp.ne.s32.totalorder %s113, %s129
    %p131 = scmp.eq.s32.totalorder %s15, 0
    %p132 = por %p130, %p131
    %p133 = scmp.le.s32.totalorder 1, %s9
    %p134 = scmp.lt.s32.totalorder %s9, 3
    %p135 = pnand %p133, %p134
    %p136 = pneg %p135
    // Predicated region
    $region9: #{entropy_tokenizer_forward.1} parent=5 // pred_check
      _
    $region10: #{entropy_tokenizer_forward.1} parent=5 // pred_check_branch
      %138 = sbr.rel (%p135) target = $region12
    $region11: #{entropy_tokenizer_forward.1} parent=5 // pred_region
      %s139 = ssub.s32 %s9, 1
      // Predicated region
      $region13: #{entropy_tokenizer_forward.1} parent=11 // pred_check
        %p140 = pneg %p73
      $region14: #{entropy_tokenizer_forward.1} parent=11 // pred_check_branch
        %142 = sbr.rel (%p140) target = $region16
      $region15: #{entropy_tokenizer_forward.1} parent=11 // pred_region
        %p143 = scmp.lt.s32.totalorder %s18, 0
        %s144 = scalar_select %p143, %s18, 0
        %s145 = smul.addr %s144, 4
        %s146 = scalar_lea.vmem %s1, %s145
      $region16: #{entropy_tokenizer_forward.1} parent=11 // pred_fallthru
        _
    $region12: #{entropy_tokenizer_forward.1} parent=5 // pred_fallthru
      _
    %p147 = scmp.lt.s32.totalorder %s9, 2
    // Predicated region
    $region17: #{entropy_tokenizer_forward.1} parent=5 // pred_check
      %p148 = pneg %p147
    $region18: #{entropy_tokenizer_forward.1} parent=5 // pred_check_branch
      %150 = sbr.rel (%p148) target = $region20
    $region19: #{entropy_tokenizer_forward.1} parent=5 // pred_region
      // Predicated region
      $region21: #{entropy_tokenizer_forward.1} parent=19 // pred_check
        %p151 = pneg %p41
      $region22: #{entropy_tokenizer_forward.1} parent=19 // pred_check_branch
        %153 = sbr.rel (%p151) target = $region24
      $region23: #{entropy_tokenizer_forward.1} parent=19 // pred_region
        %s154 = smul.u32 16, %s17
        %p155 = scmp.lt.s32.totalorder %s154, 31
        %s156 = scalar_select %p155, %s154, 31
        %s157 = smul.addr %s156, 4
        %s158 = scalar_lea.vmem %s0, %s157
        %s159 = smul.u32 16, %s17
      $region24: #{entropy_tokenizer_forward.1} parent=19 // pred_fallthru
        _
      // Predicated region
      $region25: #{entropy_tokenizer_forward.1} parent=19 // pred_check
        %p160 = pneg %p93
      $region26: #{entropy_tokenizer_forward.1} parent=19 // pred_check_branch
        %162 = sbr.rel (%p160) target = $region28
      $region27: #{entropy_tokenizer_forward.1} parent=19 // pred_region
        %s163 = smul.u32 16, %s17
        %p164 = scmp.lt.s32.totalorder %s163, 31
        %s165 = scalar_select %p164, %s163, 31
        %s166 = smul.addr %s165, 8
        %s167 = scalar_lea.vmem %s2, %s166
        %s168 = smul.u32 16, %s17
      $region28: #{entropy_tokenizer_forward.1} parent=19 // pred_fallthru
        _
    $region20: #{entropy_tokenizer_forward.1} parent=5 // pred_fallthru
      _
    %p169 = scmp.le.s32.totalorder 1, %s9
    %p170 = scmp.lt.s32.totalorder %s9, 3
    %p171 = pnand %p169, %p170
    %p172 = pneg %p171
    // Predicated region
    $region29: #{entropy_tokenizer_forward.1} parent=5 // pred_check
      _
    $region30: #{entropy_tokenizer_forward.1} parent=5 // pred_check_branch
      %174 = sbr.rel (%p171) target = $region32
    $region31: #{entropy_tokenizer_forward.1} parent=5 // pred_region
      %s175 = ssub.s32 %s9, 1
      %s176 = smul.u32 16, %s19
      %p177 = scmp.lt.s32.totalorder %s176, 31
      %s178 = scalar_select %p177, %s176, 31
      %s179 = smul.addr %s178, 4
      %s180 = scalar_lea.vmem %s0, %s179
      %p181 = pneg %p47
      %p182 = pneg %p44
      %p183 = scmp.lt.s32.totalorder %s18, 0
      %s184 = scalar_select %p183, %s18, 0
      %s185 = smul.addr %s184, 4
      %s186 = scalar_lea.vmem %s1, %s185
      %p187 = pneg %p73
      %p188 = pneg %p70
      %s189 = smul.u32 16, %s19
      %p190 = scmp.lt.s32.totalorder %s189, 31
      %s191 = scalar_select %p190, %s189, 31
      %s192 = smul.addr %s191, 8
      %s193 = scalar_lea.vmem %s2, %s192
      %p194 = pneg %p99
      %p195 = pneg %p96
      %p196 = pneg %p125
      %p197 = pneg %p122
      %p198 = scmp.lt.s32.totalorder %s18, 0
      %s199 = scalar_select %p198, %s18, 0
      %s200 = scalar_lea.vmem %s3, %s199
      %s201 = smul.u32 16, %s19
      %p202 = scmp.lt.s32.totalorder %s201, 31
      %s203 = scalar_select %p202, %s201, 31
      %s204 = smul.addr %s203, 4
      %s205 = scalar_lea.vmem %s0, %s204
      %s206 = smul.u32 16, %s19
      %p207 = scmp.lt.s32.totalorder %s18, 0
      %s208 = scalar_select %p207, %s18, 0
      %s209 = smul.addr %s208, 4
      %s210 = scalar_lea.vmem %s1, %s209
      %s211 = smul.u32 16, %s19
      %p212 = scmp.lt.s32.totalorder %s211, 31
      %s213 = scalar_select %p212, %s211, 31
      %s214 = smul.addr %s213, 8
      %s215 = scalar_lea.vmem %s2, %s214
      %s216 = smul.u32 16, %s19
      %p217 = scmp.lt.s32.totalorder %s18, 0
      %s218 = scalar_select %p217, %s18, 0
      %s219 = scalar_lea.vmem %s3, %s218
      %p221 = scmp.eq.s32.totalorder %s19, 0
      // Predicated region
      $region33: #{entropy_tokenizer_forward.1} parent=31 // pred_check
        %p222 = pneg %p221
      $region34: #{entropy_tokenizer_forward.1} parent=31 // pred_check_branch
        %224 = sbr.rel (%p222) target = $region36
      $region35: #{entropy_tokenizer_forward.1} parent=31 // pred_region
        %225 = vst [vmem:[#allocation2] sm:$0x1] -inf
        %226 = vst [vmem:[#allocation3] sm:$0x1] 0.0
        %227 = vst [vmem:[#allocation4] sm:$0x1] 0.0
      $region36: #{entropy_tokenizer_forward.1} parent=31 // pred_fallthru
        _
      %v228 = vld [vmem:[%s205] sm:$0xf]
      %v229 = vld [vmem:[%s205 + $0x4] sm:$0xf]
      %v230 = vld [vmem:[%s205 + $0x8] sm:$0xf]
      %v231 = vld [vmem:[%s205 + $0xc] sm:$0xf]
      %v232 = vld [vmem:[%s205 + $0x10] sm:$0xf]
      %v233 = vld [vmem:[%s205 + $0x14] sm:$0xf]
      %v234 = vld [vmem:[%s205 + $0x18] sm:$0xf]
      %v235 = vld [vmem:[%s205 + $0x1c] sm:$0xf]
      %v236 = vld [vmem:[%s205 + $0x20] sm:$0xf]
      %v237 = vld [vmem:[%s205 + $0x24] sm:$0xf]
      %v238 = vld [vmem:[%s205 + $0x28] sm:$0xf]
      %v239 = vld [vmem:[%s205 + $0x2c] sm:$0xf]
      %v240 = vld [vmem:[%s205 + $0x30] sm:$0xf]
      %v241 = vld [vmem:[%s205 + $0x34] sm:$0xf]
      %v242 = vld [vmem:[%s205 + $0x38] sm:$0xf]
      %v243 = vld [vmem:[%s205 + $0x3c] sm:$0xf]
      %v244 = vld [vmem:[%s210] sm:$0xf]
      %v245 = vld [vmem:[%s210 + $0x4] sm:$0xf]
      %v246 = vld [vmem:[%s210 + $0x8] sm:$0xf]
      %v247 = vld [vmem:[%s210 + $0xc] sm:$0xf]
      %v248 = vld [vmem:[%s215] sm:$0xff]
      %v249 = vld [vmem:[%s215 + $0x8] sm:$0xff]
      %v250 = vld [vmem:[%s215 + $0x10] sm:$0xff]
      %v251 = vld [vmem:[%s215 + $0x18] sm:$0xff]
      %v252 = vld [vmem:[%s215 + $0x20] sm:$0xff]
      %v253 = vld [vmem:[%s215 + $0x28] sm:$0xff]
      %v254 = vld [vmem:[%s215 + $0x30] sm:$0xff]
      %v255 = vld [vmem:[%s215 + $0x38] sm:$0xff]
      %v256 = vld [vmem:[%s215 + $0x40] sm:$0xff]
      %v257 = vld [vmem:[%s215 + $0x48] sm:$0xff]
      %v258 = vld [vmem:[%s215 + $0x50] sm:$0xff]
      %v259 = vld [vmem:[%s215 + $0x58] sm:$0xff]
      %v260 = vld [vmem:[%s215 + $0x60] sm:$0xff]
      %v261 = vld [vmem:[%s215 + $0x68] sm:$0xff]
      %v262 = vld [vmem:[%s215 + $0x70] sm:$0xff]
      %v263 = vld [vmem:[%s215 + $0x78] sm:$0xff]
      %265 = vset.pattern.permute.xlu0 0
      %266 = vperm.xlu0 %265, %v248
      %v267 = vpop.permute.xlu0 %266
      %270 = vset.pattern.permute.xlu0 0
      %271 = vperm.xlu0 %270, %v249
      %v272 = vpop.permute.xlu0 %271
      %275 = vset.pattern.permute.xlu0 0
      %276 = vperm.xlu0 %275, %v250
      %v277 = vpop.permute.xlu0 %276
      %280 = vset.pattern.permute.xlu0 0
      %281 = vperm.xlu0 %280, %v251
      %v282 = vpop.permute.xlu0 %281
      %285 = vset.pattern.permute.xlu0 0
      %286 = vperm.xlu0 %285, %v252
      %v287 = vpop.permute.xlu0 %286
      %290 = vset.pattern.permute.xlu0 0
      %291 = vperm.xlu0 %290, %v253
      %v292 = vpop.permute.xlu0 %291
      %295 = vset.pattern.permute.xlu0 0
      %296 = vperm.xlu0 %295, %v254
      %v297 = vpop.permute.xlu0 %296
      %300 = vset.pattern.permute.xlu0 0
      %301 = vperm.xlu0 %300, %v255
      %v302 = vpop.permute.xlu0 %301
      %305 = vset.pattern.permute.xlu0 0
      %306 = vperm.xlu0 %305, %v256
      %v307 = vpop.permute.xlu0 %306
      %310 = vset.pattern.permute.xlu0 0
      %311 = vperm.xlu0 %310, %v257
      %v312 = vpop.permute.xlu0 %311
      %315 = vset.pattern.permute.xlu0 0
      %316 = vperm.xlu0 %315, %v258
      %v317 = vpop.permute.xlu0 %316
      %320 = vset.pattern.permute.xlu0 0
      %321 = vperm.xlu0 %320, %v259
      %v322 = vpop.permute.xlu0 %321
      %325 = vset.pattern.permute.xlu0 0
      %326 = vperm.xlu0 %325, %v260
      %v327 = vpop.permute.xlu0 %326
      %330 = vset.pattern.permute.xlu0 0
      %331 = vperm.xlu0 %330, %v261
      %v332 = vpop.permute.xlu0 %331
      %335 = vset.pattern.permute.xlu0 0
      %336 = vperm.xlu0 %335, %v262
      %v337 = vpop.permute.xlu0 %336
      %340 = vset.pattern.permute.xlu0 0
      %341 = vperm.xlu0 %340, %v263
      %v342 = vpop.permute.xlu0 %341
      %v360 = vunpack.c.l.b16 %v228
      %v361 = vunpack.c.l.b16 %v229
      %v362 = vunpack.c.l.b16 %v230
      %v363 = vunpack.c.l.b16 %v231
      %v364 = vunpack.c.l.b16 %v232
      %v365 = vunpack.c.l.b16 %v233
      %v366 = vunpack.c.l.b16 %v234
      %v367 = vunpack.c.l.b16 %v235
      %v368 = vunpack.c.l.b16 %v236
      %v369 = vunpack.c.l.b16 %v237
      %v370 = vunpack.c.l.b16 %v238
      %v371 = vunpack.c.l.b16 %v239
      %v372 = vunpack.c.l.b16 %v240
      %v373 = vunpack.c.l.b16 %v241
      %v374 = vunpack.c.l.b16 %v242
      %v375 = vunpack.c.l.b16 %v243
      %v376 = vpack.c.b16 %v361, %v360
      %v377 = vpack.c.b16 %v363, %v362
      %v378 = vpack.c.b16 %v365, %v364
      %v379 = vpack.c.b16 %v367, %v366
      %v380 = vpack.c.b16 %v369, %v368
      %v381 = vpack.c.b16 %v371, %v370
      %v382 = vpack.c.b16 %v373, %v372
      %v383 = vpack.c.b16 %v375, %v374
      %v388 = vunpack.c.l.b16 %v244
      %v389 = vunpack.c.l.b16 %v245
      %v390 = vunpack.c.l.b16 %v246
      %v391 = vunpack.c.l.b16 %v247
      %v392 = vpack.c.b16 %v389, %v388
      %v393 = vpack.c.b16 %v391, %v390
      %vm396 = vcmask 261120
      %v398 = vsel %vm396, %v376, 0
      %v401 = vsel %vm396, %v377, 0
      %v404 = vsel %vm396, %v378, 0
      %v407 = vsel %vm396, %v379, 0
      %v410 = vsel %vm396, %v380, 0
      %v413 = vsel %vm396, %v381, 0
      %v416 = vsel %vm396, %v382, 0
      %v419 = vsel %vm396, %v383, 0
      %421 = vmatprep.subr.bf16.mxu0 0
      %422 = vmatpush1.bf16.msra.mxu0 %v392
      %423 = vmatprep.subr.bf16.mxu0 0
      %424 = vmatpush1.bf16.msra.mxu0 %v393
      %425 = vmatprep.subr.bf16.mxu0 0
      %426 = vmatpush1.bf16.msra.mxu0 0
      %427 = vmatprep.subr.bf16.mxu0 0
      %428 = vmatpush1.bf16.msra.mxu0 0
      %429 = vmatprep.subr.bf16.mxu0 0
      %430 = vmatpush1.bf16.msra.mxu0 0
      %431 = vmatprep.subr.bf16.mxu0 0
      %432 = vmatpush1.bf16.msra.mxu0 0
      %433 = vmatprep.subr.bf16.mxu0 0
      %434 = vmatpush1.bf16.msra.mxu0 0
      %435 = vmatprep.subr.bf16.mxu0 0
      %436 = vmatpush1.bf16.msra.mxu0 0
      %437 = vmatprep.subr.bf16.mxu0 0
      %438 = vmatpush1.bf16.msra.mxu0 0
      %439 = vmatprep.subr.bf16.mxu0 0
      %440 = vmatpush1.bf16.msra.mxu0 0
      %441 = vmatprep.subr.bf16.mxu0 0
      %442 = vmatpush1.bf16.msra.mxu0 0
      %443 = vmatprep.subr.bf16.mxu0 0
      %444 = vmatpush1.bf16.msra.mxu0 0
      %445 = vmatprep.subr.bf16.mxu0 0
      %446 = vmatpush1.bf16.msra.mxu0 0
      %447 = vmatprep.subr.bf16.mxu0 0
      %448 = vmatpush1.bf16.msra.mxu0 0
      %449 = vmatprep.subr.bf16.mxu0 0
      %450 = vmatpush1.bf16.msra.mxu0 0
      %451 = vmatprep.subr.bf16.mxu0 0
      %452 = vmatpush1.bf16.msra.mxu0 0
      %453 = vmatprep.mubr.bf16.mxu0 0
      %454 = vmatmul.mubr.bf16.gmra.mrb[0].mxu0 %v398
      %v455 = vpop.f32.mrb[0].mxu0
      %v456 = vadd.f32 %v267, %v455
      %v457 = vpop.f32.mrb[0].mxu0
      %v458 = vpop.f32.mrb[0].mxu0
      %v459 = vadd.f32 %v272, %v458
      %v460 = vpop.f32.mrb[0].mxu0
      %461 = vmatprep.mubr.bf16.mxu0 0
      %462 = vmatmul.mubr.bf16.gmra.mrb[0].mxu0 %v401
      %v463 = vpop.f32.mrb[0].mxu0
      %v464 = vadd.f32 %v277, %v463
      %v465 = vpop.f32.mrb[0].mxu0
      %v466 = vpop.f32.mrb[0].mxu0
      %v467 = vadd.f32 %v282, %v466
      %v468 = vpop.f32.mrb[0].mxu0
      %469 = vmatprep.mubr.bf16.mxu0 0
      %470 = vmatmul.mubr.bf16.gmra.mrb[0].mxu0 %v404
      %v471 = vpop.f32.mrb[0].mxu0
      %v472 = vadd.f32 %v287, %v471
      %v473 = vpop.f32.mrb[0].mxu0
      %v474 = vpop.f32.mrb[0].mxu0
      %v475 = vadd.f32 %v292, %v474
      %v476 = vpop.f32.mrb[0].mxu0
      %477 = vmatprep.mubr.bf16.mxu0 0
      %478 = vmatmul.mubr.bf16.gmra.mrb[0].mxu0 %v407
      %v479 = vpop.f32.mrb[0].mxu0
      %v480 = vadd.f32 %v297, %v479
      %v481 = vpop.f32.mrb[0].mxu0
      %v482 = vpop.f32.mrb[0].mxu0
      %v483 = vadd.f32 %v302, %v482
      %v484 = vpop.f32.mrb[0].mxu0
      %485 = vmatprep.mubr.bf16.mxu0 0
      %486 = vmatmul.mubr.bf16.gmra.mrb[0].mxu0 %v410
      %v487 = vpop.f32.mrb[0].mxu0
      %v488 = vadd.f32 %v307, %v487
      %v489 = vpop.f32.mrb[0].mxu0
      %v490 = vpop.f32.mrb[0].mxu0
      %v491 = vadd.f32 %v312, %v490
      %v492 = vpop.f32.mrb[0].mxu0
      %493 = vmatprep.mubr.bf16.mxu0 0
      %494 = vmatmul.mubr.bf16.gmra.mrb[0].mxu0 %v413
      %v495 = vpop.f32.mrb[0].mxu0
      %v496 = vadd.f32 %v317, %v495
      %v497 = vpop.f32.mrb[0].mxu0
      %v498 = vpop.f32.mrb[0].mxu0
      %v499 = vadd.f32 %v322, %v498
      %v500 = vpop.f32.mrb[0].mxu0
      %501 = vmatprep.mubr.bf16.mxu0 0
      %502 = vmatmul.mubr.bf16.gmra.mrb[0].mxu0 %v416
      %v503 = vpop.f32.mrb[0].mxu0
      %v504 = vadd.f32 %v327, %v503
      %v505 = vpop.f32.mrb[0].mxu0
      %v506 = vpop.f32.mrb[0].mxu0
      %v507 = vadd.f32 %v332, %v506
      %v508 = vpop.f32.mrb[0].mxu0
      %509 = vmatprep.mubr.bf16.mxu0 0
      %510 = vmatmul.mubr.bf16.gmra.mrb[0].mxu0 %v419
      %v511 = vpop.f32.mrb[0].mxu0
      %v512 = vadd.f32 %v337, %v511
      %v513 = vpop.f32.mrb[0].mxu0
      %v514 = vpop.f32.mrb[0].mxu0
      %v515 = vadd.f32 %v342, %v514
      %v516 = vpop.f32.mrb[0].mxu0
      %517 = vdwg.mxu0
      %v518 = vld [vmem:[#allocation2] sm:$0x1]
      %v519 = vmax.f32 %v456, %v472
      %v520 = vmax.f32 %v459, %v475
      %v521 = vmax.f32 %v464, %v480
      %v522 = vmax.f32 %v467, %v483
      %v523 = vmax.f32 %v519, %v488
      %v524 = vmax.f32 %v520, %v491
      %v525 = vmax.f32 %v521, %v496
      %v526 = vmax.f32 %v522, %v499
      %v527 = vmax.f32 %v523, %v504
      %v528 = vmax.f32 %v524, %v507
      %v529 = vmax.f32 %v525, %v512
      %v530 = vmax.f32 %v526, %v515
      %v531 = vmax.f32 %v527, %v528
      %v532 = vmax.f32 %v529, %v530
      %v533 = vmax.f32 %v531, %v532
      %v534 = vrot.slane %v533, 4
      %v535 = vmax.f32 %v533, %v534
      %v536 = vrot.slane %v535, 2
      %v537 = vmax.f32 %v535, %v536
      %v538 = vrot.slane %v537, 1
      %v539 = vmax.f32 %v537, %v538
      %v540 = vmax.f32 %v518, %v539
      %v541 = vsub.f32 %v518, %v540
      %v542 = vmul.f32 %v541, 1.442695
      %v543 = vpow.pop %v542
      %v545 = vlaneseq
      %v546 = vshrl.u32 %v545, 7
      %v547 = vsub.s32 0, %v546
      %v548 = vrot.slane %v540, %v547
      %v550 = vsub.f32 %v456, %v548
      %v551 = vsub.f32 %v459, %v548
      %v552 = vsub.f32 %v464, %v548
      %v553 = vsub.f32 %v467, %v548
      %v554 = vsub.f32 %v472, %v548
      %v555 = vsub.f32 %v475, %v548
      %v556 = vsub.f32 %v480, %v548
      %v557 = vsub.f32 %v483, %v548
      %v558 = vsub.f32 %v488, %v548
      %v559 = vsub.f32 %v491, %v548
      %v560 = vsub.f32 %v496, %v548
      %v561 = vsub.f32 %v499, %v548
      %v562 = vsub.f32 %v504, %v548
      %v563 = vsub.f32 %v507, %v548
      %v564 = vsub.f32 %v512, %v548
      %v565 = vsub.f32 %v515, %v548
      %v566 = vmul.f32 %v550, 1.442695
      %v567 = vpow.pop %v566
      %v568 = vmul.f32 %v551, 1.442695
      %v569 = vpow.pop %v568
      %v570 = vmul.f32 %v552, 1.442695
      %v571 = vpow.pop %v570
      %v572 = vmul.f32 %v553, 1.442695
      %v573 = vpow.pop %v572
      %v574 = vmul.f32 %v554, 1.442695
      %v575 = vpow.pop %v574
      %v576 = vmul.f32 %v555, 1.442695
      %v577 = vpow.pop %v576
      %v578 = vmul.f32 %v556, 1.442695
      %v579 = vpow.pop %v578
      %v580 = vmul.f32 %v557, 1.442695
      %v581 = vpow.pop %v580
      %v582 = vmul.f32 %v558, 1.442695
      %v583 = vpow.pop %v582
      %v584 = vmul.f32 %v559, 1.442695
      %v585 = vpow.pop %v584
      %v586 = vmul.f32 %v560, 1.442695
      %v587 = vpow.pop %v586
      %v588 = vmul.f32 %v561, 1.442695
      %v589 = vpow.pop %v588
      %v590 = vmul.f32 %v562, 1.442695
      %v591 = vpow.pop %v590
      %v592 = vmul.f32 %v563, 1.442695
      %v593 = vpow.pop %v592
      %v594 = vmul.f32 %v564, 1.442695
      %v595 = vpow.pop %v594
      %v596 = vmul.f32 %v565, 1.442695
      %v597 = vpow.pop %v596
      %v598 = vld [vmem:[#allocation3] sm:$0x1]
      %v599 = vmul.f32 %v543, %v598
      %v600 = vadd.f32 %v567, %v569
      %v601 = vadd.f32 %v600, %v571
      %v602 = vadd.f32 %v601, %v573
      %v603 = vadd.f32 %v602, %v575
      %v604 = vadd.f32 %v603, %v577
      %v605 = vadd.f32 %v604, %v579
      %v606 = vadd.f32 %v605, %v581
      %v607 = vadd.f32 %v606, %v583
      %v608 = vadd.f32 %v607, %v585
      %v609 = vadd.f32 %v608, %v587
      %v610 = vadd.f32 %v609, %v589
      %v611 = vadd.f32 %v610, %v591
      %v612 = vadd.f32 %v611, %v593
      %v613 = vadd.f32 %v612, %v595
      %v614 = vadd.f32 %v613, %v597
      %v615 = vrot.slane %v614, 4
      %v616 = vadd.f32 %v614, %v615
      %v617 = vrot.slane %v616, 2
      %v618 = vadd.f32 %v616, %v617
      %v619 = vrot.slane %v618, 1
      %v620 = vadd.f32 %v618, %v619
      %v621 = vadd.f32 %v599, %v620
      %622 = vst [vmem:[#allocation3] sm:$0x1] %v621
      %v623 = vld [vmem:[#allocation4] sm:$0x1]
      %v624 = vmul.f32 %v543, %v623
      %v625 = vmul.f32 %v567, %v456
      %v626 = vmul.f32 %v569, %v459
      %v627 = vmul.f32 %v571, %v464
      %v628 = vmul.f32 %v573, %v467
      %v629 = vmul.f32 %v575, %v472
      %v630 = vmul.f32 %v577, %v475
      %v631 = vmul.f32 %v579, %v480
      %v632 = vmul.f32 %v581, %v483
      %v633 = vmul.f32 %v583, %v488
      %v634 = vmul.f32 %v585, %v491
      %v635 = vmul.f32 %v587, %v496
      %v636 = vmul.f32 %v589, %v499
      %v637 = vmul.f32 %v591, %v504
      %v638 = vmul.f32 %v593, %v507
      %v639 = vmul.f32 %v595, %v512
      %v640 = vmul.f32 %v597, %v515
      %v641 = vadd.f32 %v625, %v626
      %v642 = vadd.f32 %v641, %v627
      %v643 = vadd.f32 %v642, %v628
      %v644 = vadd.f32 %v643, %v629
      %v645 = vadd.f32 %v644, %v630
      %v646 = vadd.f32 %v645, %v631
      %v647 = vadd.f32 %v646, %v632
      %v648 = vadd.f32 %v647, %v633
      %v649 = vadd.f32 %v648, %v634
      %v650 = vadd.f32 %v649, %v635
      %v651 = vadd.f32 %v650, %v636
      %v652 = vadd.f32 %v651, %v637
      %v653 = vadd.f32 %v652, %v638
      %v654 = vadd.f32 %v653, %v639
      %v655 = vadd.f32 %v654, %v640
      %v656 = vrot.slane %v655, 4
      %v657 = vadd.f32 %v655, %v656
      %v658 = vrot.slane %v657, 2
      %v659 = vadd.f32 %v657, %v658
      %v660 = vrot.slane %v659, 1
      %v661 = vadd.f32 %v659, %v660
      %v662 = vadd.f32 %v624, %v661
      %663 = vst [vmem:[#allocation4] sm:$0x1] %v662
      %664 = vst [vmem:[#allocation2] sm:$0x1] %v540
      %p665 = scmp.eq.s32.totalorder %s19, 1
      // Predicated region
      $region37: #{entropy_tokenizer_forward.1} parent=31 // pred_check
        %p666 = pneg %p665
      $region38: #{entropy_tokenizer_forward.1} parent=31 // pred_check_branch
        %668 = sbr.rel (%p666) target = $region40
      $region39: #{entropy_tokenizer_forward.1} parent=31 // pred_region
        %v669 = vld [vmem:[#allocation3] sm:$0x1]
        %v670 = vrcp.pop %v669
        %v671 = vld [vmem:[#allocation2] sm:$0x1]
        %v672 = vlog2.pop %v669
        %v673 = vmul.f32 %v672, 0.6931472
        %v674 = vadd.f32 %v671, %v673
        %v675 = vld [vmem:[#allocation4] sm:$0x1]
        %v676 = vmul.f32 %v675, %v670
        %v677 = vsub.f32 %v674, %v676
        %678 = vst [vmem:[%s219] sm:$0x1] %v677
      $region40: #{entropy_tokenizer_forward.1} parent=31 // pred_fallthru
        _
      %p679 = scmp.lt.s32.totalorder %s18, 0
      %s680 = scalar_select %p679, %s18, 0
      %s681 = scalar_lea.vmem %s3, %s680
      // Predicated region
      $region41: #{entropy_tokenizer_forward.1} parent=31 // pred_check
        %p682 = pneg %p122
      $region42: #{entropy_tokenizer_forward.1} parent=31 // pred_check_branch
        %684 = sbr.rel (%p682) target = $region44
      $region43: #{entropy_tokenizer_forward.1} parent=31 // pred_region
        _
      $region44: #{entropy_tokenizer_forward.1} parent=31 // pred_fallthru
        _
      // Predicated region
      $region45: #{entropy_tokenizer_forward.1} parent=31 // pred_check
        %p685 = pneg %p122
      $region46: #{entropy_tokenizer_forward.1} parent=31 // pred_check_branch
        %687 = sbr.rel (%p685) target = $region48
      $region47: #{entropy_tokenizer_forward.1} parent=31 // pred_region
        %p688 = scmp.lt.s32.totalorder %s18, 0
        %s689 = scalar_select %p688, %s18, 0
        %s690 = scalar_lea.vmem %s3, %s689
      $region48: #{entropy_tokenizer_forward.1} parent=31 // pred_fallthru
        _
    $region32: #{entropy_tokenizer_forward.1} parent=5 // pred_fallthru
      _
    %p691 = scmp.le.s32.totalorder 2, %s9
    // Predicated region
    $region49: #{entropy_tokenizer_forward.1} parent=5 // pred_check
      %p692 = pneg %p691
    $region50: #{entropy_tokenizer_forward.1} parent=5 // pred_check_branch
      %694 = sbr.rel (%p692) target = $region52
    $region51: #{entropy_tokenizer_forward.1} parent=5 // pred_region
      %s695 = ssub.s32 %s9, 2
    $region52: #{entropy_tokenizer_forward.1} parent=5 // pred_fallthru
      _
  $region6: #{entropy_tokenizer_forward.1} parent=0 // loop_footer
    %s13 = sadd.s32 1, %s9
  $region7: #{entropy_tokenizer_forward.1} parent=0 // loop_footer_branch
    %8 = sbr.rel target = $region3
  $region8: #{entropy_tokenizer_forward.1} parent=0 // loop_exit
    _

</llo_original>
